<compile_context>
chip_gen: v7x
topology: tpu7x:2x2x1
jax: 0.10.0
libtpu: 0.0.40
codegen_flags: <defaults>
</compile_context>

<pallas_src>
import jax
import jax.numpy as jnp
import numpy as np
from jax.experimental import pallas as pl
from jax.experimental.pallas import tpu as pltpu


def _round_up(n, m):
    return ((n + m - 1) // m) * m


def dqn_kernel(x_ref, w1_ref, b1_ref, w2_ref, b2_ref, w3_ref, b3_ref, o_ref):
    x = x_ref[...].astype(jnp.float32)                      # (TILE_B, num_inputs)
    num_inputs = x_ref.shape[1]

    # ---- Layer 1: Linear(num_inputs, H) + ReLU on the VPU (K is tiny). ----
    h1 = jnp.broadcast_to(b1_ref[...].astype(jnp.float32),
                          (x.shape[0], b1_ref.shape[1]))
    for k in range(num_inputs):                             # static, 4 iterations
        h1 = h1 + x[:, k:k + 1] * w1_ref[k:k + 1, :].astype(jnp.float32)
    h1 = jnp.maximum(h1, 0.0)

    # ---- Layer 2: Linear(H, H) + ReLU (MXU, f32 accumulation). ----
    h2 = jnp.dot(h1, w2_ref[...].astype(jnp.float32),
                 preferred_element_type=jnp.float32) + b2_ref[...].astype(jnp.float32)
    h2 = jnp.maximum(h2, 0.0)

    # ---- Layer 3: Linear(H, OUT_PAD) -> raw Q-values in lanes [:num_actions]. ----
    q = jnp.dot(h2, w3_ref[...].astype(jnp.float32),
                preferred_element_type=jnp.float32) + b3_ref[...].astype(jnp.float32)
    o_ref[...] = q.astype(o_ref.dtype)


def dqn_forward(x, params, *, tile_b=256, out_pad=128):
    """x: (B, num_inputs) float32. params: dict of w1,b1,w2,b2,w3,b3.

    Returns (B, num_actions) float32 Q-values.
    """
    B, num_inputs = x.shape
    H = params["w2"].shape[0]
    num_actions = params["w3"].shape[1]
    assert num_actions <= out_pad

    # Batch tile: multiple of 8 (f32 sublanes); pad the batch to a whole number
    # of tiles. tile_b<=2048 keeps double-buffered activations tiny vs VMEM.
    tile_b = _round_up(max(8, min(tile_b, _round_up(B, 8))), 8)
    b_pad = _round_up(B, tile_b)
    if b_pad != B:
        x = jnp.pad(x, ((0, b_pad - B), (0, 0)))
    grid = (b_pad // tile_b,)

    # Lane-dense output: zero-pad the last layer to `out_pad` output columns.
    w3 = jnp.pad(params["w3"], ((0, 0), (0, out_pad - num_actions)))
    b3 = jnp.pad(params["b3"], ((0, 0), (0, out_pad - num_actions)))
    w1, b1, w2, b2 = params["w1"], params["b1"], params["w2"], params["b2"]

    # Weight/bias blocks: constant block index -> fetched once, VMEM-resident.
    def resident(shape):
        return pl.BlockSpec(shape, lambda i: (0, 0))

    flops = 2 * b_pad * (num_inputs * H + H * H + H * out_pad)
    bytes_accessed = sum(int(np.prod(a.shape)) * a.dtype.itemsize
                         for a in (x, w1, b1, w2, b2, w3, b3))
    bytes_accessed += b_pad * out_pad * 4                   # output writeback

    out = pl.pallas_call(
        dqn_kernel,
        out_shape=jax.ShapeDtypeStruct((b_pad, out_pad), jnp.float32),
        grid=grid,
        in_specs=[
            pl.BlockSpec((tile_b, num_inputs), lambda i: (i, 0)),  # streamed x
            resident((num_inputs, H)),                             # w1
            resident((1, H)),                                      # b1
            resident((H, H)),                                      # w2
            resident((1, H)),                                      # b2
            resident((H, out_pad)),                                # w3 (padded)
            resident((1, out_pad)),                                # b3 (padded)
        ],
        out_specs=pl.BlockSpec((tile_b, out_pad), lambda i: (i, 0)),
        compiler_params=pltpu.CompilerParams(
            dimension_semantics=("parallel",)),
        cost_estimate=pl.CostEstimate(flops=flops, transcendentals=0,
                                      bytes_accessed=bytes_accessed),
    )(x, w1, b1, w2, b2, w3, b3)

    return out[:B, :num_actions]


def init_params(key, num_inputs, num_actions, hidden=128,
                weight_dtype=jnp.bfloat16):
    """PyTorch nn.Linear-style init (U[-1/sqrt(fan_in), 1/sqrt(fan_in)]).
    Weights stored in bf16 (halves weight DMA); biases stay f32."""
    def linear(k, fan_in, fan_out):
        kw, kb = jax.random.split(k)
        bound = 1.0 / np.sqrt(fan_in)
        w = jax.random.uniform(kw, (fan_in, fan_out), jnp.float32, -bound, bound)
        b = jax.random.uniform(kb, (1, fan_out), jnp.float32, -bound, bound)
        return w.astype(weight_dtype), b

    k1, k2, k3 = jax.random.split(key, 3)
    w1, b1 = linear(k1, num_inputs, hidden)
    w2, b2 = linear(k2, hidden, hidden)
    w3, b3 = linear(k3, hidden, num_actions)
    return {"w1": w1, "b1": b1, "w2": w2, "b2": b2, "w3": w3, "b3": b3}


def reference_forward(x, p):
    f32 = lambda a: jnp.asarray(a, jnp.float32)
    h1 = jnp.maximum(x @ f32(p["w1"]) + f32(p["b1"]), 0.0)
    h2 = jnp.maximum(h1 @ f32(p["w2"]) + f32(p["b2"]), 0.0)
    return h2 @ f32(p["w3"]) + f32(p["b3"])


# TODO(synk): DQN.act() (epsilon-greedy sampling via Python `random` and gym's
# action space) is host-side control flow, not a kernel concern; argmax over the
# returned Q-values gives the greedy action.

if __name__ == "__main__":
    # CartPole-v0: observation dim = 4, action space = 2.
    NUM_INPUTS = 4
    NUM_ACTIONS = 2
    BATCH = 50          # deliberately not a multiple of the tile -> exercises padding
    TILE_B = 32         # small demo tile (multiple of 8); use 256+ for real batches

    key = jax.random.PRNGKey(0)
    kx, kp = jax.random.split(key)
    x = jax.random.normal(kx, (BATCH, NUM_INPUTS), jnp.float32)
    params = init_params(kp, NUM_INPUTS, NUM_ACTIONS)

    q_values = dqn_forward(x, params, tile_b=TILE_B)
    q_values = jax.block_until_ready(q_values)

    q_ref = jax.block_until_ready(reference_forward(x, params))
    assert q_values.shape == (BATCH, NUM_ACTIONS)
    np.testing.assert_allclose(np.asarray(q_values), np.asarray(q_ref),
                               rtol=2e-3, atol=2e-3)
    print("KERNEL_OK")
</pallas_src>

<mosaic_0001>
module attributes {stable_mosaic.version = 11 : i64} {
  func.func @dqn_kernel(%arg0: i32, %arg1: memref<32x4xf32, #tpu.memory_space<vmem>>, %arg2: memref<4x128xbf16, #tpu.memory_space<vmem>>, %arg3: memref<1x128xf32, #tpu.memory_space<vmem>>, %arg4: memref<128x128xbf16, #tpu.memory_space<vmem>>, %arg5: memref<1x128xf32, #tpu.memory_space<vmem>>, %arg6: memref<128x128xbf16, #tpu.memory_space<vmem>>, %arg7: memref<1x128xf32, #tpu.memory_space<vmem>>, %arg8: memref<32x128xf32, #tpu.memory_space<vmem>>) attributes {dimension_semantics = [#tpu.dimension_semantics<parallel>], iteration_bounds = array<i64: 2>, scalar_prefetch = 0 : i64, scratch_operands = 0 : i64, tpu.core_type = #tpu.core_type<tc>, window_params = [{transform_indices = @transform_0, window_bounds = array<i64: 32, 4>}, {pipeline_mode = #tpu.pipeline_mode<synchronous>, transform_indices = @transform_1, window_bounds = array<i64: 4, 128>}, {pipeline_mode = #tpu.pipeline_mode<synchronous>, transform_indices = @transform_2, window_bounds = array<i64: 1, 128>}, {pipeline_mode = #tpu.pipeline_mode<synchronous>, transform_indices = @transform_3, window_bounds = array<i64: 128, 128>}, {pipeline_mode = #tpu.pipeline_mode<synchronous>, transform_indices = @transform_4, window_bounds = array<i64: 1, 128>}, {pipeline_mode = #tpu.pipeline_mode<synchronous>, transform_indices = @transform_5, window_bounds = array<i64: 128, 128>}, {pipeline_mode = #tpu.pipeline_mode<synchronous>, transform_indices = @transform_6, window_bounds = array<i64: 1, 128>}, {transform_indices = @transform_7, window_bounds = array<i64: 32, 128>}]} {
    %c0 = arith.constant 0 : index
    %c0_0 = arith.constant 0 : index
    %0 = vector.load %arg1[%c0, %c0_0] : memref<32x4xf32, #tpu.memory_space<vmem>>, vector<32x4xf32>
    %c0_1 = arith.constant 0 : index
    %c0_2 = arith.constant 0 : index
    %1 = vector.load %arg3[%c0_1, %c0_2] : memref<1x128xf32, #tpu.memory_space<vmem>>, vector<1x128xf32>
    %2 = vector.shape_cast %1 : vector<1x128xf32> to vector<1x128xf32>
    %3 = vector.broadcast %2 : vector<1x128xf32> to vector<32x128xf32>
    %4 = vector.extract_strided_slice %0 {offsets = [0, 0], sizes = [32, 1], strides = [1, 1]} : vector<32x4xf32> to vector<32x1xf32>
    %c0_3 = arith.constant 0 : index
    %c0_4 = arith.constant 0 : index
    %5 = vector.load %arg2[%c0_3, %c0_4] : memref<4x128xbf16, #tpu.memory_space<vmem>>, vector<1x128xbf16>
    %6 = arith.extf %5 : vector<1x128xbf16> to vector<1x128xf32>
    %7 = vector.broadcast %4 : vector<32x1xf32> to vector<32x128xf32>
    %8 = vector.broadcast %6 : vector<1x128xf32> to vector<32x128xf32>
    %9 = arith.mulf %7, %8 : vector<32x128xf32>
    %10 = arith.addf %3, %9 : vector<32x128xf32>
    %11 = vector.extract_strided_slice %0 {offsets = [0, 1], sizes = [32, 1], strides = [1, 1]} : vector<32x4xf32> to vector<32x1xf32>
    %c1 = arith.constant 1 : index
    %c0_5 = arith.constant 0 : index
    %12 = vector.load %arg2[%c1, %c0_5] : memref<4x128xbf16, #tpu.memory_space<vmem>>, vector<1x128xbf16>
    %13 = arith.extf %12 : vector<1x128xbf16> to vector<1x128xf32>
    %14 = vector.broadcast %11 : vector<32x1xf32> to vector<32x128xf32>
    %15 = vector.broadcast %13 : vector<1x128xf32> to vector<32x128xf32>
    %16 = arith.mulf %14, %15 : vector<32x128xf32>
    %17 = arith.addf %10, %16 : vector<32x128xf32>
    %18 = vector.extract_strided_slice %0 {offsets = [0, 2], sizes = [32, 1], strides = [1, 1]} : vector<32x4xf32> to vector<32x1xf32>
    %c2 = arith.constant 2 : index
    %c0_6 = arith.constant 0 : index
    %19 = vector.load %arg2[%c2, %c0_6] : memref<4x128xbf16, #tpu.memory_space<vmem>>, vector<1x128xbf16>
    %20 = arith.extf %19 : vector<1x128xbf16> to vector<1x128xf32>
    %21 = vector.broadcast %18 : vector<32x1xf32> to vector<32x128xf32>
    %22 = vector.broadcast %20 : vector<1x128xf32> to vector<32x128xf32>
    %23 = arith.mulf %21, %22 : vector<32x128xf32>
    %24 = arith.addf %17, %23 : vector<32x128xf32>
    %25 = vector.extract_strided_slice %0 {offsets = [0, 3], sizes = [32, 1], strides = [1, 1]} : vector<32x4xf32> to vector<32x1xf32>
    %c3 = arith.constant 3 : index
    %c0_7 = arith.constant 0 : index
    %26 = vector.load %arg2[%c3, %c0_7] : memref<4x128xbf16, #tpu.memory_space<vmem>>, vector<1x128xbf16>
    %27 = arith.extf %26 : vector<1x128xbf16> to vector<1x128xf32>
    %28 = vector.broadcast %25 : vector<32x1xf32> to vector<32x128xf32>
    %29 = vector.broadcast %27 : vector<1x128xf32> to vector<32x128xf32>
    %30 = arith.mulf %28, %29 : vector<32x128xf32>
    %31 = arith.addf %24, %30 : vector<32x128xf32>
    %cst = arith.constant 0.000000e+00 : f32
    %32 = vector.broadcast %cst : f32 to vector<32x128xf32>
    %33 = arith.maximumf %31, %32 : vector<32x128xf32>
    %c0_8 = arith.constant 0 : index
    %c0_9 = arith.constant 0 : index
    %34 = vector.load %arg4[%c0_8, %c0_9] : memref<128x128xbf16, #tpu.memory_space<vmem>>, vector<128x128xbf16>
    %35 = arith.extf %34 : vector<128x128xbf16> to vector<128x128xf32>
    %cst_10 = arith.constant dense<0.000000e+00> : vector<32x128xf32>
    %36 = tpu.matmul %33, %35, %cst_10 {dimension_numbers = #tpu.dot_dimension_numbers<[1], [0], [0], [1], [0, 0, 1, 1], [], []>} : vector<32x128xf32>, vector<128x128xf32>, vector<32x128xf32> -> vector<32x128xf32>
    %c0_11 = arith.constant 0 : index
    %c0_12 = arith.constant 0 : index
    %37 = vector.load %arg5[%c0_11, %c0_12] : memref<1x128xf32, #tpu.memory_space<vmem>>, vector<1x128xf32>
    %38 = vector.broadcast %37 : vector<1x128xf32> to vector<32x128xf32>
    %39 = arith.addf %36, %38 : vector<32x128xf32>
    %cst_13 = arith.constant 0.000000e+00 : f32
    %40 = vector.broadcast %cst_13 : f32 to vector<32x128xf32>
    %41 = arith.maximumf %39, %40 : vector<32x128xf32>
    %c0_14 = arith.constant 0 : index
    %c0_15 = arith.constant 0 : index
    %42 = vector.load %arg6[%c0_14, %c0_15] : memref<128x128xbf16, #tpu.memory_space<vmem>>, vector<128x128xbf16>
    %43 = arith.extf %42 : vector<128x128xbf16> to vector<128x128xf32>
    %cst_16 = arith.constant dense<0.000000e+00> : vector<32x128xf32>
    %44 = tpu.matmul %41, %43, %cst_16 {dimension_numbers = #tpu.dot_dimension_numbers<[1], [0], [0], [1], [0, 0, 1, 1], [], []>} : vector<32x128xf32>, vector<128x128xf32>, vector<32x128xf32> -> vector<32x128xf32>
    %c0_17 = arith.constant 0 : index
    %c0_18 = arith.constant 0 : index
    %45 = vector.load %arg7[%c0_17, %c0_18] : memref<1x128xf32, #tpu.memory_space<vmem>>, vector<1x128xf32>
    %46 = vector.broadcast %45 : vector<1x128xf32> to vector<32x128xf32>
    %47 = arith.addf %44, %46 : vector<32x128xf32>
    %c0_19 = arith.constant 0 : index
    %c0_20 = arith.constant 0 : index
    %48 = vector.load %arg8[%c0_19, %c0_20] : memref<32x128xf32, #tpu.memory_space<vmem>>, vector<32x128xf32>
    tpu.vector_store %arg8[%c0_19, %c0_20], %47 {strides = array<i32>} : memref<32x128xf32, #tpu.memory_space<vmem>>, vector<32x128xf32>,
    return
  }
  func.func @transform_0(%arg0: i32) -> (i32, i32) {
    %c0_i32 = arith.constant 0 : i32
    %c0_i32_0 = arith.constant 0 : i32
    return %arg0, %c0_i32 : i32, i32
  }
  func.func @transform_1(%arg0: i32) -> (i32, i32) {
    %c0_i32 = arith.constant 0 : i32
    %c0_i32_0 = arith.constant 0 : i32
    %c0_i32_1 = arith.constant 0 : i32
    return %c0_i32, %c0_i32_0 : i32, i32
  }
  func.func @transform_2(%arg0: i32) -> (i32, i32) {
    %c0_i32 = arith.constant 0 : i32
    %c0_i32_0 = arith.constant 0 : i32
    %c0_i32_1 = arith.constant 0 : i32
    return %c0_i32, %c0_i32_0 : i32, i32
  }
  func.func @transform_3(%arg0: i32) -> (i32, i32) {
    %c0_i32 = arith.constant 0 : i32
    %c0_i32_0 = arith.constant 0 : i32
    %c0_i32_1 = arith.constant 0 : i32
    return %c0_i32, %c0_i32_0 : i32, i32
  }
  func.func @transform_4(%arg0: i32) -> (i32, i32) {
    %c0_i32 = arith.constant 0 : i32
    %c0_i32_0 = arith.constant 0 : i32
    %c0_i32_1 = arith.constant 0 : i32
    return %c0_i32, %c0_i32_0 : i32, i32
  }
  func.func @transform_5(%arg0: i32) -> (i32, i32) {
    %c0_i32 = arith.constant 0 : i32
    %c0_i32_0 = arith.constant 0 : i32
    %c0_i32_1 = arith.constant 0 : i32
    return %c0_i32, %c0_i32_0 : i32, i32
  }
  func.func @transform_6(%arg0: i32) -> (i32, i32) {
    %c0_i32 = arith.constant 0 : i32
    %c0_i32_0 = arith.constant 0 : i32
    %c0_i32_1 = arith.constant 0 : i32
    return %c0_i32, %c0_i32_0 : i32, i32
  }
  func.func @transform_7(%arg0: i32) -> (i32, i32) {
    %c0_i32 = arith.constant 0 : i32
    %c0_i32_0 = arith.constant 0 : i32
    return %arg0, %c0_i32 : i32, i32
  }
}

</mosaic_0001>

<llo_original>
// kernel: tpu_custom_call.1
$region0: #{tpu_custom_call.1}
  #allocation0 [shape = 'u32[]', space=smem, size = 0x4, offset = 0x4, fixed_abs, tag = 'smem constant byte address 0x4 - core index']
  #allocation1 [shape = 'u32[144,128]{1,0:T(1,128)}', space=vmem, size = 0x12000, scoped, tag = 'internal scratch']
  %s0 = inlined_call_operand.vmem [shape: f32[64,4], index: 0, kind: input, shape index: {}]
  %s1 = inlined_call_operand.vmem [shape: bf16[4,128], index: 1, kind: input, shape index: {}]
  %s2 = inlined_call_operand.vmem [shape: f32[1,128], index: 2, kind: input, shape index: {}]
  %s3 = inlined_call_operand.vmem [shape: bf16[128,128], index: 3, kind: input, shape index: {}]
  %s4 = inlined_call_operand.vmem [shape: f32[1,128], index: 4, kind: input, shape index: {}]
  %s5 = inlined_call_operand.hbm [shape: bf16[128,128], index: 5, kind: input, shape index: {}]
  %s6 = inlined_call_operand.vmem [shape: f32[1,128], index: 6, kind: input, shape index: {}]
  %s7 = inlined_call_operand.hbm [shape: f32[64,128], index: 7, kind: output, shape index: {}]
  %s8 = sld [smem:[#allocation0]]
  $region65: #{tpu_custom_call.1} parent=0
    _
  %s10 = ssub.s32 1, %s8
  %s11 = scalar_select 0, %s10, %s8
  $region1: #{tpu_custom_call.1} parent=0
    #allocation2 [shape = 'u8[32768]{0}', space=vmem, size = 0x8000, scoped, tag = 'input window, operand 5, single buffered']
    #allocation3 [shape = 's32[2]{0}', space=sflag, size = 0x8, scoped, tag = 'scoped memory for tpu_custom_call.1']
    #allocation4 [shape = 's32[2]{0}', space=sflag, size = 0x8, scoped, tag = 'scoped memory for tpu_custom_call.1']
    #allocation5 [shape = 'u8[32768]{0}', space=vmem, size = 0x8000, scoped, tag = 'output window, operand 0']
    %12 = vsyncpa [#allocation3], 0
    %13 = vsyncpa [#allocation4], 0
    %s14 = scalar_lea.sflag [#allocation4], 1
    %15 = vsyncpa %s14, 0
    loop: start=0, step=1, limit=4
    $region2: #{tpu_custom_call.1} parent=1 // loop_pre_header
      _
    $region3: #{tpu_custom_call.1} parent=1 // loop_header
      %s17 = sphi 0, %s21
      %p18 = scmp.ge.s32.totalorder %s17, 4
      %s27 = sphi 0, %s29
      %s30 = sphi 0, %s27
      %s31 = sphi 0, %s30
      %s47 = sphi 0, %s31
      %s51 = sphi 0, %s51
      %s53 = sphi 0, %s51
      %s54 = sphi 0, %s53
      %s68 = sphi 0, %s54
      %s72 = sphi 0, %s72
      %s74 = sphi 0, %s72
      %s75 = sphi 0, %s74
      %s89 = sphi 0, %s75
      %s93 = sphi 0, %s93
      %s95 = sphi 0, %s93
      %s96 = sphi 0, %s95
      %s110 = sphi 0, %s96
      %s114 = sphi 0, %s114
      %s116 = sphi 0, %s114
      %s117 = sphi 0, %s116
      %s131 = sphi 0, %s117
      %s135 = sphi 0, %s135
      %s137 = sphi 0, %s135
      %s138 = sphi 0, %s137
      %s152 = sphi 0, %s138
      %s156 = sphi 0, %s156
      %s158 = sphi 0, %s156
      %s159 = sphi 0, %s158
      %s173 = sphi 0, %s159
      %s179 = sphi 0, %s181
      %s182 = sphi 0, %s179
      %s183 = sphi 0, %s182
      %s199 = sphi 0, %s183
    $region4: #{tpu_custom_call.1} parent=1 // loop_header_branch
      %20 = sbr.rel (%p18) target = $region8
    $region5: #{tpu_custom_call.1} parent=1 // loop_body
      %s22 = ssub.s32 %s17, 1
      %s23 = ssub.s32 %s17, 2
      %s24 = sadd.s32 %s17, 1
      %s25 = ssub.s32 %s17, %s24
      %p26 = scmp.eq.s32.totalorder %s25, 0
      %s28 = sadd.s32 %s27, 1
      %s29 = scalar_select %p26, %s27, %s28
      %p32 = pneg %p26
      %p33 = scmp.eq.s32.totalorder %s17, 1
      %p34 = por %p32, %p33
      %p35 = scmp.ne.s32.totalorder %s27, %s30
      %p36 = scmp.eq.s32.totalorder %s17, 0
      %p37 = por %p35, %p36
      %p38 = scmp.ne.s32.totalorder %s27, %s30
      %p39 = scmp.eq.s32.totalorder %s22, 1
      %p40 = por %p38, %p39
      %p41 = scmp.ne.s32.totalorder %s30, %s31
      %p42 = scmp.eq.s32.totalorder %s22, 0
      %p43 = por %p41, %p42
      %p44 = scmp.ne.s32.totalorder %s30, %s31
      %p45 = scmp.eq.s32.totalorder %s23, 1
      %p46 = por %p44, %p45
      %p48 = scmp.ne.s32.totalorder %s31, %s47
      %p49 = scmp.eq.s32.totalorder %s23, 0
      %p50 = por %p48, %p49
      %s52 = sadd.s32 %s51, 1
      %p55 = scmp.eq.s32.totalorder %s17, 1
      %p56 = scmp.ne.s32.totalorder %s51, %s53
      %p57 = scmp.eq.s32.totalorder %s17, 0
      %p58 = por %p56, %p57
      %p59 = scmp.ne.s32.totalorder %s51, %s53
      %p60 = scmp.eq.s32.totalorder %s22, 1
      %p61 = por %p59, %p60
      %p62 = scmp.ne.s32.totalorder %s53, %s54
      %p63 = scmp.eq.s32.totalorder %s22, 0
      %p64 = por %p62, %p63
      %p65 = scmp.ne.s32.totalorder %s53, %s54
      %p66 = scmp.eq.s32.totalorder %s23, 1
      %p67 = por %p65, %p66
      %p69 = scmp.ne.s32.totalorder %s54, %s68
      %p70 = scmp.eq.s32.totalorder %s23, 0
      %p71 = por %p69, %p70
      %s73 = sadd.s32 %s72, 1
      %p76 = scmp.eq.s32.totalorder %s17, 1
      %p77 = scmp.ne.s32.totalorder %s72, %s74
      %p78 = scmp.eq.s32.totalorder %s17, 0
      %p79 = por %p77, %p78
      %p80 = scmp.ne.s32.totalorder %s72, %s74
      %p81 = scmp.eq.s32.totalorder %s22, 1
      %p82 = por %p80, %p81
      %p83 = scmp.ne.s32.totalorder %s74, %s75
      %p84 = scmp.eq.s32.totalorder %s22, 0
      %p85 = por %p83, %p84
      %p86 = scmp.ne.s32.totalorder %s74, %s75
      %p87 = scmp.eq.s32.totalorder %s23, 1
      %p88 = por %p86, %p87
      %p90 = scmp.ne.s32.totalorder %s75, %s89
      %p91 = scmp.eq.s32.totalorder %s23, 0
      %p92 = por %p90, %p91
      %s94 = sadd.s32 %s93, 1
      %p97 = scmp.eq.s32.totalorder %s17, 1
      %p98 = scmp.ne.s32.totalorder %s93, %s95
      %p99 = scmp.eq.s32.totalorder %s17, 0
      %p100 = por %p98, %p99
      %p101 = scmp.ne.s32.totalorder %s93, %s95
      %p102 = scmp.eq.s32.totalorder %s22, 1
      %p103 = por %p101, %p102
      %p104 = scmp.ne.s32.totalorder %s95, %s96
      %p105 = scmp.eq.s32.totalorder %s22, 0
      %p106 = por %p104, %p105
      %p107 = scmp.ne.s32.totalorder %s95, %s96
      %p108 = scmp.eq.s32.totalorder %s23, 1
      %p109 = por %p107, %p108
      %p111 = scmp.ne.s32.totalorder %s96, %s110
      %p112 = scmp.eq.s32.totalorder %s23, 0
      %p113 = por %p111, %p112
      %s115 = sadd.s32 %s114, 1
      %p118 = scmp.eq.s32.totalorder %s17, 1
      %p119 = scmp.ne.s32.totalorder %s114, %s116
      %p120 = scmp.eq.s32.totalorder %s17, 0
      %p121 = por %p119, %p120
      %p122 = scmp.ne.s32.totalorder %s114, %s116
      %p123 = scmp.eq.s32.totalorder %s22, 1
      %p124 = por %p122, %p123
      %p125 = scmp.ne.s32.totalorder %s116, %s117
      %p126 = scmp.eq.s32.totalorder %s22, 0
      %p127 = por %p125, %p126
      %p128 = scmp.ne.s32.totalorder %s116, %s117
      %p129 = scmp.eq.s32.totalorder %s23, 1
      %p130 = por %p128, %p129
      %p132 = scmp.ne.s32.totalorder %s117, %s131
      %p133 = scmp.eq.s32.totalorder %s23, 0
      %p134 = por %p132, %p133
      %s136 = sadd.s32 %s135, 1
      %p139 = scmp.eq.s32.totalorder %s17, 1
      %p140 = scmp.ne.s32.totalorder %s135, %s137
      %p141 = scmp.eq.s32.totalorder %s17, 0
      %p142 = por %p140, %p141
      %p143 = scmp.ne.s32.totalorder %s135, %s137
      %p144 = scmp.eq.s32.totalorder %s22, 1
      %p145 = por %p143, %p144
      %p146 = scmp.ne.s32.totalorder %s137, %s138
      %p147 = scmp.eq.s32.totalorder %s22, 0
      %p148 = por %p146, %p147
      %p149 = scmp.ne.s32.totalorder %s137, %s138
      %p150 = scmp.eq.s32.totalorder %s23, 1
      %p151 = por %p149, %p150
      %p153 = scmp.ne.s32.totalorder %s138, %s152
      %p154 = scmp.eq.s32.totalorder %s23, 0
      %p155 = por %p153, %p154
      %s157 = sadd.s32 %s156, 1
      %p160 = scmp.eq.s32.totalorder %s17, 1
      %p161 = scmp.ne.s32.totalorder %s156, %s158
      %p162 = scmp.eq.s32.totalorder %s17, 0
      %p163 = por %p161, %p162
      %p164 = scmp.ne.s32.totalorder %s156, %s158
      %p165 = scmp.eq.s32.totalorder %s22, 1
      %p166 = por %p164, %p165
      %p167 = scmp.ne.s32.totalorder %s158, %s159
      %p168 = scmp.eq.s32.totalorder %s22, 0
      %p169 = por %p167, %p168
      %p170 = scmp.ne.s32.totalorder %s158, %s159
      %p171 = scmp.eq.s32.totalorder %s23, 1
      %p172 = por %p170, %p171
      %p174 = scmp.ne.s32.totalorder %s159, %s173
      %p175 = scmp.eq.s32.totalorder %s23, 0
      %p176 = por %p174, %p175
      %s177 = ssub.s32 %s17, %s24
      %p178 = scmp.eq.s32.totalorder %s177, 0
      %s180 = sadd.s32 %s179, 1
      %s181 = scalar_select %p178, %s179, %s180
      %p184 = pneg %p178
      %p185 = scmp.eq.s32.totalorder %s17, 1
      %p186 = por %p184, %p185
      %p187 = scmp.ne.s32.totalorder %s179, %s182
      %p188 = scmp.eq.s32.totalorder %s17, 0
      %p189 = por %p187, %p188
      %p190 = scmp.ne.s32.totalorder %s179, %s182
      %p191 = scmp.eq.s32.totalorder %s22, 1
      %p192 = por %p190, %p191
      %p193 = scmp.ne.s32.totalorder %s182, %s183
      %p194 = scmp.eq.s32.totalorder %s22, 0
      %p195 = por %p193, %p194
      %p196 = scmp.ne.s32.totalorder %s182, %s183
      %p197 = scmp.eq.s32.totalorder %s23, 1
      %p198 = por %p196, %p197
      %p200 = scmp.ne.s32.totalorder %s183, %s199
      %p201 = scmp.eq.s32.totalorder %s23, 0
      %p202 = por %p200, %p201
      %p203 = scmp.le.s32.totalorder 1, %s17
      %p204 = scmp.lt.s32.totalorder %s17, 3
      %p205 = pnand %p203, %p204
      %p206 = pneg %p205
      // Predicated region
      $region9: #{tpu_custom_call.1} parent=5 // pred_check
        _
      $region10: #{tpu_custom_call.1} parent=5 // pred_check_branch
        %208 = sbr.rel (%p205) target = $region12
      $region11: #{tpu_custom_call.1} parent=5 // pred_region
        %s209 = ssub.s32 %s17, 1
        // Predicated region
        $region13: #{tpu_custom_call.1} parent=11 // pred_check
          %p210 = pneg %p64
        $region14: #{tpu_custom_call.1} parent=11 // pred_check_branch
          %212 = sbr.rel (%p210) target = $region16
        $region15: #{tpu_custom_call.1} parent=11 // pred_region
          _
        $region16: #{tpu_custom_call.1} parent=11 // pred_fallthru
          _
        // Predicated region
        $region17: #{tpu_custom_call.1} parent=11 // pred_check
          %p213 = pneg %p85
        $region18: #{tpu_custom_call.1} parent=11 // pred_check_branch
          %215 = sbr.rel (%p213) target = $region20
        $region19: #{tpu_custom_call.1} parent=11 // pred_region
          _
        $region20: #{tpu_custom_call.1} parent=11 // pred_fallthru
          _
        // Predicated region
        $region21: #{tpu_custom_call.1} parent=11 // pred_check
          %p216 = pneg %p106
        $region22: #{tpu_custom_call.1} parent=11 // pred_check_branch
          %218 = sbr.rel (%p216) target = $region24
        $region23: #{tpu_custom_call.1} parent=11 // pred_region
          _
        $region24: #{tpu_custom_call.1} parent=11 // pred_fallthru
          _
        // Predicated region
        $region25: #{tpu_custom_call.1} parent=11 // pred_check
          %p219 = pneg %p127
        $region26: #{tpu_custom_call.1} parent=11 // pred_check_branch
          %221 = sbr.rel (%p219) target = $region28
        $region27: #{tpu_custom_call.1} parent=11 // pred_region
          _
        $region28: #{tpu_custom_call.1} parent=11 // pred_fallthru
          _
        // Predicated region
        $region29: #{tpu_custom_call.1} parent=11 // pred_check
          %p222 = pneg %p148
        $region30: #{tpu_custom_call.1} parent=11 // pred_check_branch
          %224 = sbr.rel (%p222) target = $region32
        $region31: #{tpu_custom_call.1} parent=11 // pred_region
          %s226 = ssub.s32 1024, 1024
          %227 = vsyncadd [#allocation3], %s226
          %s228 = sshll.u32 [#allocation2], 4
          %s229 = int_to_ptr.vmem [resolvable:$true] %s228
          %234 = dma.hbm_to_vmem [thread:$0]  %s5, 1024, %s229, [#allocation3], 64, 64, 4
        $region32: #{tpu_custom_call.1} parent=11 // pred_fallthru
          _
        // Predicated region
        $region33: #{tpu_custom_call.1} parent=11 // pred_check
          %p235 = pneg %p169
        $region34: #{tpu_custom_call.1} parent=11 // pred_check_branch
          %237 = sbr.rel (%p235) target = $region36
        $region35: #{tpu_custom_call.1} parent=11 // pred_region
          _
        $region36: #{tpu_custom_call.1} parent=11 // pred_fallthru
          _
      $region12: #{tpu_custom_call.1} parent=5 // pred_fallthru
        _
      %p238 = scmp.lt.s32.totalorder %s17, 2
      // Predicated region
      $region37: #{tpu_custom_call.1} parent=5 // pred_check
        %p239 = pneg %p238
      $region38: #{tpu_custom_call.1} parent=5 // pred_check_branch
        %241 = sbr.rel (%p239) target = $region40
      $region39: #{tpu_custom_call.1} parent=5 // pred_region
        // Predicated region
        $region41: #{tpu_custom_call.1} parent=39 // pred_check
          %p242 = pneg %p37
        $region42: #{tpu_custom_call.1} parent=39 // pred_check_branch
          %244 = sbr.rel (%p242) target = $region44
        $region43: #{tpu_custom_call.1} parent=39 // pred_region
          %s245 = smul.u32 4, %s17
          %p246 = scmp.lt.s32.totalorder %s245, 7
          %s247 = scalar_select %p246, %s245, 7
          %s248 = smul.addr %s247, 8
          %s249 = scalar_lea.vmem %s0, %s248
          %s250 = smul.u32 4, %s17
        $region44: #{tpu_custom_call.1} parent=39 // pred_fallthru
          _
      $region40: #{tpu_custom_call.1} parent=5 // pred_fallthru
        _
      %p251 = scmp.le.s32.totalorder 1, %s17
      %p252 = scmp.lt.s32.totalorder %s17, 3
      %p253 = pnand %p251, %p252
      %p254 = pneg %p253
      // Predicated region
      $region45: #{tpu_custom_call.1} parent=5 // pred_check
        _
      $region46: #{tpu_custom_call.1} parent=5 // pred_check_branch
        %256 = sbr.rel (%p253) target = $region48
      $region47: #{tpu_custom_call.1} parent=5 // pred_region
        %s257 = ssub.s32 %s17, 1
        // Predicated region
        $region49: #{tpu_custom_call.1} parent=47 // pred_check
          %p258 = pneg %p148
        $region50: #{tpu_custom_call.1} parent=47 // pred_check_branch
          %260 = sbr.rel (%p258) target = $region52
        $region51: #{tpu_custom_call.1} parent=47 // pred_region
          %261 = dma.done [#allocation3], 1024
        $region52: #{tpu_custom_call.1} parent=47 // pred_fallthru
          _
        %s262 = smul.u32 4, %s22
        %p263 = scmp.lt.s32.totalorder %s262, 7
        %s264 = scalar_select %p263, %s262, 7
        %s265 = smul.addr %s264, 8
        %s266 = scalar_lea.vmem %s0, %s265
        %p267 = pneg %p43
        %p268 = pneg %p40
        %p269 = pneg %p64
        %p270 = pneg %p61
        %p271 = pneg %p85
        %p272 = pneg %p82
        %p273 = pneg %p106
        %p274 = pneg %p103
        %p275 = pneg %p127
        %p276 = pneg %p124
        %p277 = pneg %p148
        %p278 = pneg %p145
        %p279 = pneg %p169
        %p280 = pneg %p166
        %p281 = pneg %p195
        %p282 = pneg %p192
        %s283 = sand.u32 %s182, 1
        %s284 = scalar_lea.sflag [#allocation4], %s283
        %s285 = sand.u32 %s182, 1
        %s286 = smul.addr %s285, 32
        %s287 = scalar_lea.vmem [#allocation5], %s286
        %s288 = smul.u32 4, %s22
        %p289 = scmp.lt.s32.totalorder %s288, 7
        %s290 = scalar_select %p289, %s288, 7
        %s291 = smul.addr %s290, 8
        %s292 = scalar_lea.vmem %s0, %s291
        %s293 = smul.u32 4, %s22
        %s294 = smul.u32 4, %s22
        %v295 = vld [vmem:[%s292] sm:$0xff]
        %v296 = vld [vmem:[%s292 + $0x8] sm:$0xff]
        %v297 = vld [vmem:[%s292 + $0x10] sm:$0xff]
        %v298 = vld [vmem:[%s292 + $0x18] sm:$0xff]
        %v299 = vld [vmem:[%s2] sm:$0x1]
        %v301 = vlaneseq
        %v302 = vshrl.u32 %v301, 7
        %v303 = vsub.s32 0, %v302
        %v304 = vrot.slane %v299, %v303
        %v306 = vld [vmem:[%s1] sm:$0x1]
        %v307 = vunpack.c.l.bf16 %v306
        %309 = vset.pattern.permute.xlu0 0
        %310 = vperm.xlu0 %309, %v295
        %v311 = vpop.permute.xlu0 %310
        %314 = vset.pattern.permute.xlu0 0
        %315 = vperm.xlu0 %314, %v296
        %v316 = vpop.permute.xlu0 %315
        %319 = vset.pattern.permute.xlu0 0
        %320 = vperm.xlu0 %319, %v297
        %v321 = vpop.permute.xlu0 %320
        %324 = vset.pattern.permute.xlu0 0
        %325 = vperm.xlu0 %324, %v298
        %v326 = vpop.permute.xlu0 %325
        %v328 = vlaneseq
        %v329 = vshrl.u32 %v328, 7
        %v330 = vsub.s32 0, %v329
        %v331 = vrot.slane %v307, %v330
        %v332 = vmul.f32 %v311, %v331
        %v333 = vmul.f32 %v316, %v331
        %v334 = vmul.f32 %v321, %v331
        %v335 = vmul.f32 %v326, %v331
        %v336 = vadd.f32 %v304, %v332
        %v337 = vadd.f32 %v304, %v333
        %v338 = vadd.f32 %v304, %v334
        %v339 = vadd.f32 %v304, %v335
        %340 = vset.pattern.permute.xlu0 1
        %341 = vperm.xlu0 %340, %v295
        %v342 = vpop.permute.xlu0 %341
        %344 = vset.pattern.permute.xlu0 1
        %345 = vperm.xlu0 %344, %v296
        %v346 = vpop.permute.xlu0 %345
        %348 = vset.pattern.permute.xlu0 1
        %349 = vperm.xlu0 %348, %v297
        %v350 = vpop.permute.xlu0 %349
        %352 = vset.pattern.permute.xlu0 1
        %353 = vperm.xlu0 %352, %v298
        %v354 = vpop.permute.xlu0 %353
        %v356 = vlaneseq
        %v357 = vshrl.u32 %v356, 7
        %v358 = vsub.s32 1, %v357
        %v359 = vrot.slane %v307, %v358
        %v360 = vmul.f32 %v342, %v359
        %v361 = vmul.f32 %v346, %v359
        %v362 = vmul.f32 %v350, %v359
        %v363 = vmul.f32 %v354, %v359
        %v364 = vadd.f32 %v336, %v360
        %v365 = vadd.f32 %v337, %v361
        %v366 = vadd.f32 %v338, %v362
        %v367 = vadd.f32 %v339, %v363
        %v368 = vld [vmem:[%s1] sm:$0x2]
        %v369 = vunpack.c.l.bf16 %v368
        %370 = vset.pattern.permute.xlu0 2
        %371 = vperm.xlu0 %370, %v295
        %v372 = vpop.permute.xlu0 %371
        %374 = vset.pattern.permute.xlu0 2
        %375 = vperm.xlu0 %374, %v296
        %v376 = vpop.permute.xlu0 %375
        %378 = vset.pattern.permute.xlu0 2
        %379 = vperm.xlu0 %378, %v297
        %v380 = vpop.permute.xlu0 %379
        %382 = vset.pattern.permute.xlu0 2
        %383 = vperm.xlu0 %382, %v298
        %v384 = vpop.permute.xlu0 %383
        %v386 = vlaneseq
        %v387 = vshrl.u32 %v386, 7
        %v388 = vsub.s32 2, %v387
        %v389 = vrot.slane %v369, %v388
        %v390 = vmul.f32 %v372, %v389
        %v391 = vmul.f32 %v376, %v389
        %v392 = vmul.f32 %v380, %v389
        %v393 = vmul.f32 %v384, %v389
        %v394 = vadd.f32 %v364, %v390
        %v395 = vadd.f32 %v365, %v391
        %v396 = vadd.f32 %v366, %v392
        %v397 = vadd.f32 %v367, %v393
        %398 = vset.pattern.permute.xlu0 3
        %399 = vperm.xlu0 %398, %v295
        %v400 = vpop.permute.xlu0 %399
        %402 = vset.pattern.permute.xlu0 3
        %403 = vperm.xlu0 %402, %v296
        %v404 = vpop.permute.xlu0 %403
        %406 = vset.pattern.permute.xlu0 3
        %407 = vperm.xlu0 %406, %v297
        %v408 = vpop.permute.xlu0 %407
        %410 = vset.pattern.permute.xlu0 3
        %411 = vperm.xlu0 %410, %v298
        %v412 = vpop.permute.xlu0 %411
        %v414 = vlaneseq
        %v415 = vshrl.u32 %v414, 7
        %v416 = vsub.s32 3, %v415
        %v417 = vrot.slane %v369, %v416
        %v418 = vmul.f32 %v400, %v417
        %v419 = vmul.f32 %v404, %v417
        %v420 = vmul.f32 %v408, %v417
        %v421 = vmul.f32 %v412, %v417
        %v422 = vadd.f32 %v394, %v418
        %v423 = vadd.f32 %v395, %v419
        %v424 = vadd.f32 %v396, %v420
        %v425 = vadd.f32 %v397, %v421
        %v426 = vmax.f32 %v422, 0.0
        %v427 = vmax.f32 %v423, 0.0
        %v428 = vmax.f32 %v424, 0.0
        %v429 = vmax.f32 %v425, 0.0
        %v430 = vld [vmem:[%s3] sm:$0xf]
        %v431 = vld [vmem:[%s3 + $0x4] sm:$0xf]
        %v432 = vld [vmem:[%s3 + $0x8] sm:$0xf]
        %v433 = vld [vmem:[%s3 + $0xc] sm:$0xf]
        %v434 = vld [vmem:[%s3 + $0x10] sm:$0xf]
        %v435 = vld [vmem:[%s3 + $0x14] sm:$0xf]
        %v436 = vld [vmem:[%s3 + $0x18] sm:$0xf]
        %v437 = vld [vmem:[%s3 + $0x1c] sm:$0xf]
        %v438 = vld [vmem:[%s3 + $0x20] sm:$0xf]
        %v439 = vld [vmem:[%s3 + $0x24] sm:$0xf]
        %v440 = vld [vmem:[%s3 + $0x28] sm:$0xf]
        %v441 = vld [vmem:[%s3 + $0x2c] sm:$0xf]
        %v442 = vld [vmem:[%s3 + $0x30] sm:$0xf]
        %v443 = vld [vmem:[%s3 + $0x34] sm:$0xf]
        %v444 = vld [vmem:[%s3 + $0x38] sm:$0xf]
        %v445 = vld [vmem:[%s3 + $0x3c] sm:$0xf]
        %v446 = vunpack.c.l.bf16 %v430
        %v447 = vunpack.c.l.bf16 %v431
        %v448 = vunpack.c.l.bf16 %v432
        %v449 = vunpack.c.l.bf16 %v433
        %v450 = vunpack.c.l.bf16 %v434
        %v451 = vunpack.c.l.bf16 %v435
        %v452 = vunpack.c.l.bf16 %v436
        %v453 = vunpack.c.l.bf16 %v437
        %v454 = vunpack.c.l.bf16 %v438
        %v455 = vunpack.c.l.bf16 %v439
        %v456 = vunpack.c.l.bf16 %v440
        %v457 = vunpack.c.l.bf16 %v441
        %v458 = vunpack.c.l.bf16 %v442
        %v459 = vunpack.c.l.bf16 %v443
        %v460 = vunpack.c.l.bf16 %v444
        %v461 = vunpack.c.l.bf16 %v445
        %v462 = vld [vmem:[%s4] sm:$0x1]
        %v464 = vlaneseq
        %v465 = vshrl.u32 %v464, 7
        %v466 = vsub.s32 0, %v465
        %v467 = vrot.slane %v462, %v466
        %469 = vmatprep.subr.mxu0 0.0
        %470 = vmatpush1.msra.mxu0 %v446
        %471 = vmatprep.subr.mxu0 0.0
        %472 = vmatpush1.msra.mxu0 %v447
        %473 = vmatprep.subr.mxu0 0.0
        %474 = vmatpush1.msra.mxu0 %v448
        %475 = vmatprep.subr.mxu0 0.0
        %476 = vmatpush1.msra.mxu0 %v449
        %477 = vmatprep.subr.mxu0 0.0
        %478 = vmatpush1.msra.mxu0 %v450
        %479 = vmatprep.subr.mxu0 0.0
        %480 = vmatpush1.msra.mxu0 %v451
        %481 = vmatprep.subr.mxu0 0.0
        %482 = vmatpush1.msra.mxu0 %v452
        %483 = vmatprep.subr.mxu0 0.0
        %484 = vmatpush1.msra.mxu0 %v453
        %485 = vmatprep.subr.mxu0 0.0
        %486 = vmatpush1.msra.mxu0 %v454
        %487 = vmatprep.subr.mxu0 0.0
        %488 = vmatpush1.msra.mxu0 %v455
        %489 = vmatprep.subr.mxu0 0.0
        %490 = vmatpush1.msra.mxu0 %v456
        %491 = vmatprep.subr.mxu0 0.0
        %492 = vmatpush1.msra.mxu0 %v457
        %493 = vmatprep.subr.mxu0 0.0
        %494 = vmatpush1.msra.mxu0 %v458
        %495 = vmatprep.subr.mxu0 0.0
        %496 = vmatpush1.msra.mxu0 %v459
        %497 = vmatprep.subr.mxu0 0.0
        %498 = vmatpush1.msra.mxu0 %v460
        %499 = vmatprep.subr.mxu0 0.0
        %500 = vmatpush1.msra.mxu0 %v461
        %501 = vmatprep.subr.mxu0 0.0
        %502 = vmatpush1.msra.mxu0 0.0
        %503 = vmatprep.subr.mxu0 0.0
        %504 = vmatpush1.msra.mxu0 0.0
        %505 = vmatprep.subr.mxu0 0.0
        %506 = vmatpush1.msra.mxu0 0.0
        %507 = vmatprep.subr.mxu0 0.0
        %508 = vmatpush1.msra.mxu0 0.0
        %509 = vmatprep.subr.mxu0 0.0
        %510 = vmatpush1.msra.mxu0 0.0
        %511 = vmatprep.subr.mxu0 0.0
        %512 = vmatpush1.msra.mxu0 0.0
        %513 = vmatprep.subr.mxu0 0.0
        %514 = vmatpush1.msra.mxu0 0.0
        %515 = vmatprep.subr.mxu0 0.0
        %516 = vmatpush1.msra.mxu0 0.0
        %517 = vmatprep.subr.mxu0 0.0
        %518 = vmatpush1.msra.mxu0 0.0
        %519 = vmatprep.subr.mxu0 0.0
        %520 = vmatpush1.msra.mxu0 0.0
        %521 = vmatprep.subr.mxu0 0.0
        %522 = vmatpush1.msra.mxu0 0.0
        %523 = vmatprep.subr.mxu0 0.0
        %524 = vmatpush1.msra.mxu0 0.0
        %525 = vmatprep.subr.mxu0 0.0
        %526 = vmatpush1.msra.mxu0 0.0
        %527 = vmatprep.subr.mxu0 0.0
        %528 = vmatpush1.msra.mxu0 0.0
        %529 = vmatprep.subr.mxu0 0.0
        %530 = vmatpush1.msra.mxu0 0.0
        %531 = vmatprep.subr.mxu0 0.0
        %532 = vmatpush1.msra.mxu0 0.0
        %533 = vmatprep.mubr.f32.mxu0 0.0
        %534 = vmatmul.mubr.f32.gmra.mrb[0].mxu0 %v426
        %v535 = vpop.f32.mrb[0].mxu0
        %v536 = vadd.f32 %v467, %v535
        %v537 = vpop.f32.mrb[0].mxu0
        %538 = vmatprep.mubr.f32.mxu0 0.0
        %539 = vmatmul.mubr.f32.gmra.mrb[0].mxu0 %v427
        %v540 = vpop.f32.mrb[0].mxu0
        %v541 = vadd.f32 %v467, %v540
        %v542 = vpop.f32.mrb[0].mxu0
        %543 = vmatprep.mubr.f32.mxu0 0.0
        %544 = vmatmul.mubr.f32.gmra.mrb[0].mxu0 %v428
        %v545 = vpop.f32.mrb[0].mxu0
        %v546 = vadd.f32 %v467, %v545
        %v547 = vpop.f32.mrb[0].mxu0
        %548 = vmatprep.mubr.f32.mxu0 0.0
        %549 = vmatmul.mubr.f32.gmra.mrb[0].mxu0 %v429
        %v550 = vpop.f32.mrb[0].mxu0
        %v551 = vadd.f32 %v467, %v550
        %v552 = vpop.f32.mrb[0].mxu0
        %553 = vdwg.mxu0
        %v554 = vmax.f32 %v536, 0.0
        %v555 = vmax.f32 %v541, 0.0
        %v556 = vmax.f32 %v546, 0.0
        %v557 = vmax.f32 %v551, 0.0
        %v558 = vld [vmem:[#allocation2] sm:$0xf]
        %v559 = vld [vmem:[#allocation2 + $0x4] sm:$0xf]
        %v560 = vld [vmem:[#allocation2 + $0x8] sm:$0xf]
        %v561 = vld [vmem:[#allocation2 + $0xc] sm:$0xf]
        %v562 = vld [vmem:[#allocation2 + $0x10] sm:$0xf]
        %v563 = vld [vmem:[#allocation2 + $0x14] sm:$0xf]
        %v564 = vld [vmem:[#allocation2 + $0x18] sm:$0xf]
        %v565 = vld [vmem:[#allocation2 + $0x1c] sm:$0xf]
        %v566 = vld [vmem:[#allocation2 + $0x20] sm:$0xf]
        %v567 = vld [vmem:[#allocation2 + $0x24] sm:$0xf]
        %v568 = vld [vmem:[#allocation2 + $0x28] sm:$0xf]
        %v569 = vld [vmem:[#allocation2 + $0x2c] sm:$0xf]
        %v570 = vld [vmem:[#allocation2 + $0x30] sm:$0xf]
        %v571 = vld [vmem:[#allocation2 + $0x34] sm:$0xf]
        %v572 = vld [vmem:[#allocation2 + $0x38] sm:$0xf]
        %v573 = vld [vmem:[#allocation2 + $0x3c] sm:$0xf]
        %v574 = vunpack.c.l.bf16 %v558
        %v575 = vunpack.c.l.bf16 %v559
        %v576 = vunpack.c.l.bf16 %v560
        %v577 = vunpack.c.l.bf16 %v561
        %v578 = vunpack.c.l.bf16 %v562
        %v579 = vunpack.c.l.bf16 %v563
        %v580 = vunpack.c.l.bf16 %v564
        %v581 = vunpack.c.l.bf16 %v565
        %v582 = vunpack.c.l.bf16 %v566
        %v583 = vunpack.c.l.bf16 %v567
        %v584 = vunpack.c.l.bf16 %v568
        %v585 = vunpack.c.l.bf16 %v569
        %v586 = vunpack.c.l.bf16 %v570
        %v587 = vunpack.c.l.bf16 %v571
        %v588 = vunpack.c.l.bf16 %v572
        %v589 = vunpack.c.l.bf16 %v573
        %v590 = vld [vmem:[%s6] sm:$0x1]
        %v592 = vlaneseq
        %v593 = vshrl.u32 %v592, 7
        %v594 = vsub.s32 0, %v593
        %v595 = vrot.slane %v590, %v594
        %597 = vmatprep.subr.mxu0 0.0
        %598 = vmatpush1.msra.mxu0 %v574
        %599 = vmatprep.subr.mxu0 0.0
        %600 = vmatpush1.msra.mxu0 %v575
        %601 = vmatprep.subr.mxu0 0.0
        %602 = vmatpush1.msra.mxu0 %v576
        %603 = vmatprep.subr.mxu0 0.0
        %604 = vmatpush1.msra.mxu0 %v577
        %605 = vmatprep.subr.mxu0 0.0
        %606 = vmatpush1.msra.mxu0 %v578
        %607 = vmatprep.subr.mxu0 0.0
        %608 = vmatpush1.msra.mxu0 %v579
        %609 = vmatprep.subr.mxu0 0.0
        %610 = vmatpush1.msra.mxu0 %v580
        %611 = vmatprep.subr.mxu0 0.0
        %612 = vmatpush1.msra.mxu0 %v581
        %613 = vmatprep.subr.mxu0 0.0
        %614 = vmatpush1.msra.mxu0 %v582
        %615 = vmatprep.subr.mxu0 0.0
        %616 = vmatpush1.msra.mxu0 %v583
        %617 = vmatprep.subr.mxu0 0.0
        %618 = vmatpush1.msra.mxu0 %v584
        %619 = vmatprep.subr.mxu0 0.0
        %620 = vmatpush1.msra.mxu0 %v585
        %621 = vmatprep.subr.mxu0 0.0
        %622 = vmatpush1.msra.mxu0 %v586
        %623 = vmatprep.subr.mxu0 0.0
        %624 = vmatpush1.msra.mxu0 %v587
        %625 = vmatprep.subr.mxu0 0.0
        %626 = vmatpush1.msra.mxu0 %v588
        %627 = vmatprep.subr.mxu0 0.0
        %628 = vmatpush1.msra.mxu0 %v589
        %629 = vmatprep.subr.mxu0 0.0
        %630 = vmatpush1.msra.mxu0 0.0
        %631 = vmatprep.subr.mxu0 0.0
        %632 = vmatpush1.msra.mxu0 0.0
        %633 = vmatprep.subr.mxu0 0.0
        %634 = vmatpush1.msra.mxu0 0.0
        %635 = vmatprep.subr.mxu0 0.0
        %636 = vmatpush1.msra.mxu0 0.0
        %637 = vmatprep.subr.mxu0 0.0
        %638 = vmatpush1.msra.mxu0 0.0
        %639 = vmatprep.subr.mxu0 0.0
        %640 = vmatpush1.msra.mxu0 0.0
        %641 = vmatprep.subr.mxu0 0.0
        %642 = vmatpush1.msra.mxu0 0.0
        %643 = vmatprep.subr.mxu0 0.0
        %644 = vmatpush1.msra.mxu0 0.0
        %645 = vmatprep.subr.mxu0 0.0
        %646 = vmatpush1.msra.mxu0 0.0
        %647 = vmatprep.subr.mxu0 0.0
        %648 = vmatpush1.msra.mxu0 0.0
        %649 = vmatprep.subr.mxu0 0.0
        %650 = vmatpush1.msra.mxu0 0.0
        %651 = vmatprep.subr.mxu0 0.0
        %652 = vmatpush1.msra.mxu0 0.0
        %653 = vmatprep.subr.mxu0 0.0
        %654 = vmatpush1.msra.mxu0 0.0
        %655 = vmatprep.subr.mxu0 0.0
        %656 = vmatpush1.msra.mxu0 0.0
        %657 = vmatprep.subr.mxu0 0.0
        %658 = vmatpush1.msra.mxu0 0.0
        %659 = vmatprep.subr.mxu0 0.0
        %660 = vmatpush1.msra.mxu0 0.0
        %661 = vmatprep.mubr.f32.mxu0 0.0
        %662 = vmatmul.mubr.f32.gmra.mrb[0].mxu0 %v554
        %v663 = vpop.f32.mrb[0].mxu0
        %v664 = vadd.f32 %v595, %v663
        %v665 = vpop.f32.mrb[0].mxu0
        %666 = vmatprep.mubr.f32.mxu0 0.0
        %667 = vmatmul.mubr.f32.gmra.mrb[0].mxu0 %v555
        %v668 = vpop.f32.mrb[0].mxu0
        %v669 = vadd.f32 %v595, %v668
        %v670 = vpop.f32.mrb[0].mxu0
        %671 = vmatprep.mubr.f32.mxu0 0.0
        %672 = vmatmul.mubr.f32.gmra.mrb[0].mxu0 %v556
        %v673 = vpop.f32.mrb[0].mxu0
        %v674 = vadd.f32 %v595, %v673
        %v675 = vpop.f32.mrb[0].mxu0
        %676 = vmatprep.mubr.f32.mxu0 0.0
        %677 = vmatmul.mubr.f32.gmra.mrb[0].mxu0 %v557
        %v678 = vpop.f32.mrb[0].mxu0
        %v679 = vadd.f32 %v595, %v678
        %v680 = vpop.f32.mrb[0].mxu0
        %681 = vdwg.mxu0
        %682 = vst [vmem:[%s287] sm:$0xff] %v664
        %683 = vst [vmem:[%s287 + $0x8] sm:$0xff] %v669
        %684 = vst [vmem:[%s287 + $0x10] sm:$0xff] %v674
        %685 = vst [vmem:[%s287 + $0x18] sm:$0xff] %v679
        %s686 = sand.u32 %s182, 1
        %s687 = scalar_lea.sflag [#allocation4], %s686
        %s688 = sand.u32 %s182, 1
        %s689 = smul.addr %s688, 32
        %s690 = scalar_lea.vmem [#allocation5], %s689
        // Predicated region
        $region53: #{tpu_custom_call.1} parent=47 // pred_check
          %p691 = pneg %p192
        $region54: #{tpu_custom_call.1} parent=47 // pred_check_branch
          %693 = sbr.rel (%p691) target = $region56
        $region55: #{tpu_custom_call.1} parent=47 // pred_region
          %s694 = smul.u32 4, %s22
          %s696 = ssub.s32 512, 512
          %697 = vsyncadd %s687, %s696
          %s698 = smul.addr %s694, 128
          %s699 = scalar_lea.hbm %s7, %s698
          %s700 = sshll.u32 %s690, 4
          %s701 = int_to_ptr.vmem [resolvable:$true] %s700
          %706 = dma.vmem_to_hbm [thread:$0]  %s701, 512, %s699, %s687, 128, 128, 8
        $region56: #{tpu_custom_call.1} parent=47 // pred_fallthru
          _
      $region48: #{tpu_custom_call.1} parent=5 // pred_fallthru
        _
      %p707 = scmp.le.s32.totalorder 2, %s17
      // Predicated region
      $region57: #{tpu_custom_call.1} parent=5 // pred_check
        %p708 = pneg %p707
      $region58: #{tpu_custom_call.1} parent=5 // pred_check_branch
        %710 = sbr.rel (%p708) target = $region60
      $region59: #{tpu_custom_call.1} parent=5 // pred_region
        %s711 = ssub.s32 %s17, 2
        // Predicated region
        $region61: #{tpu_custom_call.1} parent=59 // pred_check
          %p712 = pneg %p198
        $region62: #{tpu_custom_call.1} parent=59 // pred_check_branch
          %714 = sbr.rel (%p712) target = $region64
        $region63: #{tpu_custom_call.1} parent=59 // pred_region
          %s715 = sand.u32 %s183, 1
          %s716 = scalar_lea.sflag [#allocation4], %s715
          %s717 = sand.u32 %s183, 1
          %s718 = smul.addr %s717, 32
          %s719 = scalar_lea.vmem [#allocation5], %s718
          %720 = dma.done %s716, 512
        $region64: #{tpu_custom_call.1} parent=59 // pred_fallthru
          _
      $region60: #{tpu_custom_call.1} parent=5 // pred_fallthru
        _
    $region6: #{tpu_custom_call.1} parent=1 // loop_footer
      %s21 = sadd.s32 1, %s17
    $region7: #{tpu_custom_call.1} parent=1 // loop_footer_branch
      %16 = sbr.rel target = $region3
    $region8: #{tpu_custom_call.1} parent=1 // loop_exit
      _
    %721 = vsyncpa [#allocation3], 1
    %s722 = scalar_lea.sflag [#allocation3], 1
    %723 = vsyncpa %s722, 1
    %724 = vsyncpa [#allocation4], 1
    %s725 = scalar_lea.sflag [#allocation4], 1
    %726 = vsyncpa %s725, 1

</llo_original>
